<compile_context>
chip_gen: v7x
topology: tpu7x:2x2x1
jax: 0.10.0
libtpu: 0.0.40
codegen_flags: <defaults>
</compile_context>

<pallas_src>
import math

import jax
import jax.numpy as jnp
from jax import lax
from jax.experimental import pallas as pl
from jax.experimental.pallas import tpu as pltpu

_LANE = 128


# --------------------------------------------------------------------------
# Pallas kernel: out[:, jO] = z @ weight[jO, :].T + bias[jO]
# --------------------------------------------------------------------------
def _hyper_linear_bias_kernel(z_ref, w_ref, b_ref, out_ref):
    # z_ref:   [B,  Z]   f32   (resident across the whole grid)
    # w_ref:   [tO, Z]   f32   (streamed tile of the weight)
    # b_ref:   [1,  tO]  f32
    # out_ref: [B,  tO]  f32
    out_ref[...] = (
        lax.dot_general(
            z_ref[...],
            w_ref[...],
            dimension_numbers=(((1,), (1,)), ((), ())),  # contract last dims
            preferred_element_type=jnp.float32,
        )
        + b_ref[...]
    )


def hyper_linear_bias_forward(z, weight, bias, *, tile_o: int = 512):
    """param = F.linear(z, weight, bias) via a Pallas TPU kernel.

    z:      [..., Z]  float32
    weight: [O, Z]    float32   (PyTorch nn.Linear convention)
    bias:   [O]       float32
    returns [..., O]  float32
    """
    z = jnp.asarray(z, jnp.float32)
    weight = jnp.asarray(weight, jnp.float32)
    bias = jnp.asarray(bias, jnp.float32)

    lead_shape = z.shape[:-1]
    Z = z.shape[-1]
    z2d = z.reshape((-1, Z))                      # [B, Z]
    B = z2d.shape[0]
    O = weight.shape[0]

    # ---- choose a lane-dense O tile (multiple of 128) and pad O to it ----
    o_lane = ((O + _LANE - 1) // _LANE) * _LANE   # O rounded up to 128
    tO = max(_LANE, min(int(tile_o), o_lane))
    tO = (tO // _LANE) * _LANE                    # force multiple of 128
    O_pad = ((O + tO - 1) // tO) * tO

    if O_pad != O:
        weight = jnp.pad(weight, ((0, O_pad - O), (0, 0)))
        bias = jnp.pad(bias, ((0, O_pad - O),))
    bias2d = bias.reshape((1, O_pad))

    n_o_tiles = O_pad // tO

    out = pl.pallas_call(
        _hyper_linear_bias_kernel,
        out_shape=jax.ShapeDtypeStruct((B, O_pad), jnp.float32),
        grid_spec=pl.GridSpec(
            grid=(n_o_tiles,),
            in_specs=[
                # z is small and revisited -> same block every step (resident).
                pl.BlockSpec((B, Z), lambda j: (0, 0)),
                # weight streamed tile-by-tile over O (double-buffered DMA).
                pl.BlockSpec((tO, Z), lambda j: (j, 0)),
                pl.BlockSpec((1, tO), lambda j: (0, j)),
            ],
            out_specs=pl.BlockSpec((B, tO), lambda j: (0, j)),
        ),
        compiler_params=pltpu.CompilerParams(
            # Independent output tiles -> parallel (2 TCs on v7x).
            dimension_semantics=("parallel",),
        ),
        cost_estimate=pl.CostEstimate(
            flops=2 * B * O_pad * Z,
            transcendentals=0,
            bytes_accessed=4 * (B * Z + O_pad * Z + B * O_pad + O_pad),
        ),
    )(z2d, weight, bias2d)

    if O_pad != O:
        out = out[:, :O]
    return out.reshape(lead_shape + (O,))


# --------------------------------------------------------------------------
# Deterministic parameter construction matching HyperLinearBias.__init__
# --------------------------------------------------------------------------
def init_hyper_linear_bias_params(key, z_size, output_shape,
                                  target_init="torch", has_bias=True):
    output_dim = output_shape[0]          # num_param
    if target_init == "tf":
        weight = jnp.zeros((output_dim, z_size), jnp.float32)
    elif target_init == "torch":
        f_in = output_shape[1]
        bound = 1.0 / math.sqrt(f_in)
        weight = jax.random.uniform(
            key, (output_dim, z_size), jnp.float32, minval=-bound, maxval=bound
        )
    else:
        raise ValueError(target_init)
    bias = jnp.zeros((output_dim,), jnp.float32)  # zeros whether trainable or not
    return weight, bias


# --------------------------------------------------------------------------
if __name__ == "__main__":
    key = jax.random.PRNGKey(0)

    # --- Case 1: toy shapes matching the module defaults -----------------
    #   z_size = 8, output_shape = (32, 16) -> output_dim = 32, batch = 2
    z_size = 8
    output_shape = (32, 16)
    batch = 2

    k_w, k_z, k_w2, k_z2 = jax.random.split(key, 4)
    weight, bias = init_hyper_linear_bias_params(
        k_w, z_size, output_shape, target_init="torch", has_bias=True
    )
    z = jax.random.normal(k_z, (batch, z_size), jnp.float32)

    out = hyper_linear_bias_forward(z, weight, bias)
    out = jax.block_until_ready(out)

    ref = z @ weight.T + bias[None, :]
    assert out.shape == (batch, output_shape[0])
    assert jnp.allclose(out, ref, atol=1e-5, rtol=1e-5), (
        f"max err {jnp.max(jnp.abs(out - ref))}"
    )

    # --- Case 2: non-128-multiple O and multi-dim batch (exercises padding,
    #             O-tiling and the leading-dim flatten/restore path) --------
    z_size2 = 8
    output_shape2 = (300, 16)     # O=300 -> padded to 384, single 384 tile
    weight2, bias2 = init_hyper_linear_bias_params(
        k_w2, z_size2, output_shape2, target_init="torch", has_bias=True
    )
    z2 = jax.random.normal(k_z2, (2, 3, z_size2), jnp.float32)

    out2 = hyper_linear_bias_forward(z2, weight2, bias2, tile_o=128)
    out2 = jax.block_until_ready(out2)

    ref2 = jnp.einsum("...z,oz->...o", z2, weight2) + bias2
    assert out2.shape == (2, 3, output_shape2[0])
    assert jnp.allclose(out2, ref2, atol=1e-5, rtol=1e-5), (
        f"max err {jnp.max(jnp.abs(out2 - ref2))}"
    )

    print("KERNEL_OK")
</pallas_src>

<mosaic_0001>
module attributes {stable_mosaic.version = 11 : i64} {
  func.func @_hyper_linear_bias_kernel(%arg0: i32, %arg1: memref<2x8xf32, #tpu.memory_space<vmem>>, %arg2: memref<128x8xf32, #tpu.memory_space<vmem>>, %arg3: memref<1x128xf32, #tpu.memory_space<vmem>>, %arg4: memref<2x128xf32, #tpu.memory_space<vmem>>) attributes {dimension_semantics = [#tpu.dimension_semantics<parallel>], iteration_bounds = array<i64: 1>, scalar_prefetch = 0 : i64, scratch_operands = 0 : i64, tpu.core_type = #tpu.core_type<tc>, window_params = [{pipeline_mode = #tpu.pipeline_mode<synchronous>, transform_indices = @transform_0, window_bounds = array<i64: 2, 8>}, {transform_indices = @transform_1, window_bounds = array<i64: 128, 8>}, {transform_indices = @transform_2, window_bounds = array<i64: 1, 128>}, {transform_indices = @transform_3, window_bounds = array<i64: 2, 128>}]} {
    %c0 = arith.constant 0 : index
    %c0_0 = arith.constant 0 : index
    %0 = vector.load %arg1[%c0, %c0_0] : memref<2x8xf32, #tpu.memory_space<vmem>>, vector<2x8xf32>
    %c0_1 = arith.constant 0 : index
    %c0_2 = arith.constant 0 : index
    %1 = vector.load %arg2[%c0_1, %c0_2] : memref<128x8xf32, #tpu.memory_space<vmem>>, vector<128x8xf32>
    %cst = arith.constant dense<0.000000e+00> : vector<2x128xf32>
    %2 = tpu.matmul %0, %1, %cst {dimension_numbers = #tpu.dot_dimension_numbers<[1], [1], [0], [0], [0, 0, 1, 0], [], []>} : vector<2x8xf32>, vector<128x8xf32>, vector<2x128xf32> -> vector<2x128xf32>
    %c0_3 = arith.constant 0 : index
    %c0_4 = arith.constant 0 : index
    %3 = vector.load %arg3[%c0_3, %c0_4] : memref<1x128xf32, #tpu.memory_space<vmem>>, vector<1x128xf32>
    %4 = vector.broadcast %3 : vector<1x128xf32> to vector<2x128xf32>
    %5 = arith.addf %2, %4 : vector<2x128xf32>
    %c0_5 = arith.constant 0 : index
    %c0_6 = arith.constant 0 : index
    %6 = vector.load %arg4[%c0_5, %c0_6] : memref<2x128xf32, #tpu.memory_space<vmem>>, vector<2x128xf32>
    tpu.vector_store %arg4[%c0_5, %c0_6], %5 {strides = array<i32>} : memref<2x128xf32, #tpu.memory_space<vmem>>, vector<2x128xf32>,
    return
  }
  func.func @transform_0(%arg0: i32) -> (i32, i32) {
    %c0_i32 = arith.constant 0 : i32
    %c0_i32_0 = arith.constant 0 : i32
    %c0_i32_1 = arith.constant 0 : i32
    return %c0_i32, %c0_i32_0 : i32, i32
  }
  func.func @transform_1(%arg0: i32) -> (i32, i32) {
    %c0_i32 = arith.constant 0 : i32
    %c0_i32_0 = arith.constant 0 : i32
    return %arg0, %c0_i32 : i32, i32
  }
  func.func @transform_2(%arg0: i32) -> (i32, i32) {
    %c0_i32 = arith.constant 0 : i32
    %c0_i32_0 = arith.constant 0 : i32
    return %c0_i32, %arg0 : i32, i32
  }
  func.func @transform_3(%arg0: i32) -> (i32, i32) {
    %c0_i32 = arith.constant 0 : i32
    %c0_i32_0 = arith.constant 0 : i32
    return %c0_i32, %arg0 : i32, i32
  }
}

</mosaic_0001>

<llo_original>
// kernel: tpu_custom_call.1
$region0: #{tpu_custom_call.1}
  #allocation0 [shape = 'u32[]', space=smem, size = 0x4, offset = 0x4, fixed_abs, tag = 'smem constant byte address 0x4 - core index']
  #allocation1 [shape = 'u32[144,128]{1,0:T(1,128)}', space=vmem, size = 0x12000, scoped, tag = 'internal scratch']
  %s0 = inlined_call_operand.vmem [shape: f32[2,8], index: 0, kind: input, shape index: {}]
  %s1 = inlined_call_operand.vmem [shape: f32[128,8], index: 1, kind: input, shape index: {}]
  %s2 = inlined_call_operand.vmem [shape: f32[1,128], index: 2, kind: input, shape index: {}]
  %s3 = inlined_call_operand.hbm [shape: f32[2,128], index: 3, kind: output, shape index: {}]
  %s4 = sld [smem:[#allocation0]]
  $region22: #{tpu_custom_call.1} parent=0
    _
  %s6 = ssub.s32 1, %s4
  %s7 = scalar_select 0, %s6, %s4
  $region1: #{tpu_custom_call.1} parent=0
    #allocation2 [shape = 'u8[1024]{0}', space=vmem, size = 0x400, scoped, tag = 'output window, operand 0, single buffered']
    #allocation3 [shape = 's32[1]{0}', space=sflag, size = 0x4, scoped, tag = 'scoped memory for tpu_custom_call.1']
    %8 = vsyncpa [#allocation3], 0
    // Predicated region
    $region2: #{tpu_custom_call.1} parent=1 // pred_check
      _
    $region3: #{tpu_custom_call.1} parent=1 // pred_check_branch
      %10 = sbr.rel (0) target = $region5
    $region4: #{tpu_custom_call.1} parent=1 // pred_region
      _
    $region5: #{tpu_custom_call.1} parent=1 // pred_fallthru
      _
    // Predicated region
    $region6: #{tpu_custom_call.1} parent=1 // pred_check
      _
    $region7: #{tpu_custom_call.1} parent=1 // pred_check_branch
      %12 = sbr.rel (0) target = $region9
    $region8: #{tpu_custom_call.1} parent=1 // pred_region
      _
    $region9: #{tpu_custom_call.1} parent=1 // pred_fallthru
      _
    // Predicated region
    $region10: #{tpu_custom_call.1} parent=1 // pred_check
      _
    $region11: #{tpu_custom_call.1} parent=1 // pred_check_branch
      %14 = sbr.rel (0) target = $region13
    $region12: #{tpu_custom_call.1} parent=1 // pred_region
      _
    $region13: #{tpu_custom_call.1} parent=1 // pred_fallthru
      _
    %v15 = vld [vmem:[%s0] sm:$0x3]
    %v16 = vld [vmem:[%s1] sm:$0xff]
    %v17 = vld [vmem:[%s1 + $0x8] sm:$0xff]
    %v18 = vld [vmem:[%s1 + $0x10] sm:$0xff]
    %v19 = vld [vmem:[%s1 + $0x18] sm:$0xff]
    %v20 = vld [vmem:[%s1 + $0x20] sm:$0xff]
    %v21 = vld [vmem:[%s1 + $0x28] sm:$0xff]
    %v22 = vld [vmem:[%s1 + $0x30] sm:$0xff]
    %v23 = vld [vmem:[%s1 + $0x38] sm:$0xff]
    %v24 = vld [vmem:[%s1 + $0x40] sm:$0xff]
    %v25 = vld [vmem:[%s1 + $0x48] sm:$0xff]
    %v26 = vld [vmem:[%s1 + $0x50] sm:$0xff]
    %v27 = vld [vmem:[%s1 + $0x58] sm:$0xff]
    %v28 = vld [vmem:[%s1 + $0x60] sm:$0xff]
    %v29 = vld [vmem:[%s1 + $0x68] sm:$0xff]
    %v30 = vld [vmem:[%s1 + $0x70] sm:$0xff]
    %v31 = vld [vmem:[%s1 + $0x78] sm:$0xff]
    %v32 = vld [vmem:[%s2] sm:$0x1]
    %v34 = vlaneseq
    %v35 = vshrl.u32 %v34, 7
    %v36 = vsub.s32 0, %v35
    %v37 = vrot.slane %v32, %v36
    %vm39 = vcmask 64512
    %v41 = vsel %vm39, %v15, 0
    %v44 = vsel %vm39, %v16, 0
    %v47 = vsel %vm39, %v17, 0
    %v50 = vsel %vm39, %v18, 0
    %v53 = vsel %vm39, %v19, 0
    %v56 = vsel %vm39, %v20, 0
    %v59 = vsel %vm39, %v21, 0
    %v62 = vsel %vm39, %v22, 0
    %v65 = vsel %vm39, %v23, 0
    %v68 = vsel %vm39, %v24, 0
    %v71 = vsel %vm39, %v25, 0
    %v74 = vsel %vm39, %v26, 0
    %v77 = vsel %vm39, %v27, 0
    %v80 = vsel %vm39, %v28, 0
    %v83 = vsel %vm39, %v29, 0
    %v86 = vsel %vm39, %v30, 0
    %v89 = vsel %vm39, %v31, 0
    %91 = vmatprep.subr.mxu0 0.0
    %92 = vmatpush1.xpose.msra.mxu0 %v44
    %93 = vmatprep.subr.mxu0 0.0
    %94 = vmatpush1.xpose.msra.mxu0 %v47
    %95 = vmatprep.subr.mxu0 0.0
    %96 = vmatpush1.xpose.msra.mxu0 %v50
    %97 = vmatprep.subr.mxu0 0.0
    %98 = vmatpush1.xpose.msra.mxu0 %v53
    %99 = vmatprep.subr.mxu0 0.0
    %100 = vmatpush1.xpose.msra.mxu0 %v56
    %101 = vmatprep.subr.mxu0 0.0
    %102 = vmatpush1.xpose.msra.mxu0 %v59
    %103 = vmatprep.subr.mxu0 0.0
    %104 = vmatpush1.xpose.msra.mxu0 %v62
    %105 = vmatprep.subr.mxu0 0.0
    %106 = vmatpush1.xpose.msra.mxu0 %v65
    %107 = vmatprep.subr.mxu0 0.0
    %108 = vmatpush1.xpose.msra.mxu0 %v68
    %109 = vmatprep.subr.mxu0 0.0
    %110 = vmatpush1.xpose.msra.mxu0 %v71
    %111 = vmatprep.subr.mxu0 0.0
    %112 = vmatpush1.xpose.msra.mxu0 %v74
    %113 = vmatprep.subr.mxu0 0.0
    %114 = vmatpush1.xpose.msra.mxu0 %v77
    %115 = vmatprep.subr.mxu0 0.0
    %116 = vmatpush1.xpose.msra.mxu0 %v80
    %117 = vmatprep.subr.mxu0 0.0
    %118 = vmatpush1.xpose.msra.mxu0 %v83
    %119 = vmatprep.subr.mxu0 0.0
    %120 = vmatpush1.xpose.msra.mxu0 %v86
    %121 = vmatprep.subr.mxu0 0.0
    %122 = vmatpush1.xpose.msra.mxu0 %v89
    %123 = vmatprep.subr.mxu0 0.0
    %124 = vmatpush1.xpose.msra.mxu0 0.0
    %125 = vmatprep.subr.mxu0 0.0
    %126 = vmatpush1.xpose.msra.mxu0 0.0
    %127 = vmatprep.subr.mxu0 0.0
    %128 = vmatpush1.xpose.msra.mxu0 0.0
    %129 = vmatprep.subr.mxu0 0.0
    %130 = vmatpush1.xpose.msra.mxu0 0.0
    %131 = vmatprep.subr.mxu0 0.0
    %132 = vmatpush1.xpose.msra.mxu0 0.0
    %133 = vmatprep.subr.mxu0 0.0
    %134 = vmatpush1.xpose.msra.mxu0 0.0
    %135 = vmatprep.subr.mxu0 0.0
    %136 = vmatpush1.xpose.msra.mxu0 0.0
    %137 = vmatprep.subr.mxu0 0.0
    %138 = vmatpush1.xpose.msra.mxu0 0.0
    %139 = vmatprep.subr.mxu0 0.0
    %140 = vmatpush1.xpose.msra.mxu0 0.0
    %141 = vmatprep.subr.mxu0 0.0
    %142 = vmatpush1.xpose.msra.mxu0 0.0
    %143 = vmatprep.subr.mxu0 0.0
    %144 = vmatpush1.xpose.msra.mxu0 0.0
    %145 = vmatprep.subr.mxu0 0.0
    %146 = vmatpush1.xpose.msra.mxu0 0.0
    %147 = vmatprep.subr.mxu0 0.0
    %148 = vmatpush1.xpose.msra.mxu0 0.0
    %149 = vmatprep.subr.mxu0 0.0
    %150 = vmatpush1.xpose.msra.mxu0 0.0
    %151 = vmatprep.subr.mxu0 0.0
    %152 = vmatpush1.xpose.msra.mxu0 0.0
    %153 = vmatprep.subr.mxu0 0.0
    %154 = vmatpush1.xpose.msra.mxu0 0.0
    %155 = vmatprep.mubr.f32.mxu0 0.0
    %156 = vmatmul.mubr.f32.gmra.mrb[0].mxu0 %v41
    %v157 = vpop.f32.mrb[0].mxu0
    %v158 = vadd.f32 %v37, %v157
    %v159 = vpop.f32.mrb[0].mxu0
    %160 = vdwg.mxu0
    %161 = vst [vmem:[#allocation2] sm:$0x3] %v158
    // Predicated region
    $region14: #{tpu_custom_call.1} parent=1 // pred_check
      _
    $region15: #{tpu_custom_call.1} parent=1 // pred_check_branch
      %163 = sbr.rel (0) target = $region17
    $region16: #{tpu_custom_call.1} parent=1 // pred_region
      %s165 = ssub.s32 32, 32
      %166 = vsyncadd [#allocation3], %s165
      %s168 = sshll.u32 [#allocation2], 4
      %s169 = int_to_ptr.vmem [resolvable:$true] %s168
      %171 = dma.vmem_to_hbm [thread:$0]  %s169, 32, %s3, [#allocation3]
    $region17: #{tpu_custom_call.1} parent=1 // pred_fallthru
      _
    // Predicated region
    $region18: #{tpu_custom_call.1} parent=1 // pred_check
      _
    $region19: #{tpu_custom_call.1} parent=1 // pred_check_branch
      %173 = sbr.rel (0) target = $region21
    $region20: #{tpu_custom_call.1} parent=1 // pred_region
      %174 = dma.done [#allocation3], 32
    $region21: #{tpu_custom_call.1} parent=1 // pred_fallthru
      _
    %175 = vsyncpa [#allocation3], 1

</llo_original>
